<compile_context>
chip_gen: v5e
topology: v5e:2x2
jax: 0.10.0
libtpu: 0.0.40
codegen_flags: <defaults>
</compile_context>

<pallas_src>
import functools

import jax
import jax.numpy as jnp
from jax.experimental import pallas as pl
from jax.experimental.pallas import tpu as pltpu


def _round_up(x, m):
    return ((x + m - 1) // m) * m


def _pick_tile_hw(hw, c, in_bytes, vmem_budget_bytes=8 * 1024 * 1024):
    """Largest lane-aligned HW tile that keeps double-buffered inputs + f32 temps
    well under a conservative VMEM budget (sized for v7x's 32 MiB scoped VMEM)."""
    per_lane = 2 * (c * in_bytes + 4) + 6 * c * 4  # 2x-buffered blocks + ~6 [C,T] f32 temps
    t = (vmem_budget_bytes // per_lane) // 128 * 128
    t = max(128, min(int(t), 4096))
    return min(t, _round_up(hw, 128))


def _dice_partial_kernel(logits_ref, target_ref, out_ref,
                         num_acc, psq_acc, cnt_acc, *, smooth, ignore_index):
    # logits_ref: [1, C, T] (f32 or bf16)   target_ref: [1, 1, T] int32
    # out_ref:    [1, C, 128] f32           accumulators: [C, 1] f32
    t = pl.program_id(1)

    @pl.when(t == 0)
    def _():
        num_acc[...] = jnp.zeros_like(num_acc)
        psq_acc[...] = jnp.zeros_like(psq_acc)
        cnt_acc[...] = jnp.zeros_like(cnt_acc)

    logits = logits_ref[0].astype(jnp.float32)          # [C, T]
    tgt = target_ref[0]                                 # [1, T] int32

    # softmax over the class (sublane) axis; one reciprocal instead of C divides
    m = jnp.max(logits, axis=0, keepdims=True)          # [1, T]
    e = jnp.exp(logits - m)                             # [C, T]
    probs = e * pl.reciprocal(jnp.sum(e, axis=0, keepdims=True), approx=False)

    valid = tgt != jnp.int32(ignore_index)              # [1, T] bool
    class_ids = jax.lax.broadcasted_iota(jnp.int32, logits.shape, 0)  # [C, T]
    match = tgt == class_ids                            # [C, T] bool; == onehot*valid ...
    if ignore_index >= 0:
        # ... except when ignore_index is itself a class id: mask it explicitly.
        match = jnp.logical_and(match, valid)

    vm = valid.astype(jnp.float32)                      # [1, T]

    num_acc[...] += jnp.sum(jnp.where(match, probs, 0.0), axis=1, keepdims=True)
    psq_acc[...] += jnp.sum(probs * probs * vm, axis=1, keepdims=True)
    cnt_acc[...] += jnp.sum(match.astype(jnp.float32), axis=1, keepdims=True)

    @pl.when(t == pl.num_programs(1) - 1)
    def _():
        num = num_acc[...] * 2.0 + smooth               # [C, 1]
        den = psq_acc[...] + cnt_acc[...] + smooth      # [C, 1]
        loss_c = 1.0 - num / den                        # [C, 1]
        out_ref[0] = jnp.broadcast_to(loss_c, out_ref.shape[1:])  # lane-dense [C, 128]


def dice_loss(logits_nchw, target_nhw, *, smooth=1.0, ignore_index=-1, tile_hw=None):
    """logits_nchw: f32/bf16 [N, C, H, W]; target_nhw: int [N, H, W] with labels in
    [0, C-1] or ignore_index. Returns scalar f32 dice loss (softmax + per-class
    binary dice with valid mask, mean over batch, summed over classes / C)."""
    N, C, H, W = logits_nchw.shape
    HW = H * W

    in_dtype = logits_nchw.dtype
    if in_dtype != jnp.bfloat16:
        in_dtype = jnp.float32
    logits = logits_nchw.reshape(N, C, HW).astype(in_dtype)
    # TODO(synk): targets kept int32; int8/int16 targets would shave a little more DMA.
    target = target_nhw.reshape(N, 1, HW).astype(jnp.int32)

    in_bytes = jnp.dtype(in_dtype).itemsize
    if tile_hw is None:
        tile_hw = _pick_tile_hw(HW, C, in_bytes)
    tile_hw = max(128, _round_up(int(tile_hw), 128))

    hw_pad = _round_up(HW, tile_hw)
    if hw_pad != HW:
        # Padded pixels: logits=0 (finite softmax), target=ignore_index (masked out).
        logits = jnp.pad(logits, ((0, 0), (0, 0), (0, hw_pad - HW)))
        target = jnp.pad(target, ((0, 0), (0, 0), (0, hw_pad - HW)),
                         constant_values=jnp.int32(ignore_index))
    n_tiles = hw_pad // tile_hw

    kernel = functools.partial(
        _dice_partial_kernel, smooth=float(smooth), ignore_index=int(ignore_index)
    )

    out = pl.pallas_call(
        kernel,
        out_shape=jax.ShapeDtypeStruct((N, C, 128), jnp.float32),
        grid=(N, n_tiles),
        in_specs=[
            pl.BlockSpec((1, C, tile_hw), lambda n, t: (n, 0, t)),
            pl.BlockSpec((1, 1, tile_hw), lambda n, t: (n, 0, t)),
        ],
        out_specs=pl.BlockSpec((1, C, 128), lambda n, t: (n, 0, 0)),
        scratch_shapes=[
            pltpu.VMEM((C, 1), jnp.float32),   # sum(p * onehot * vm)
            pltpu.VMEM((C, 1), jnp.float32),   # sum(p^2 * vm)
            pltpu.VMEM((C, 1), jnp.float32),   # sum(onehot * vm)  (valid pixel count)
        ],
        compiler_params=pltpu.CompilerParams(
            dimension_semantics=("parallel", "arbitrary"),
        ),
    )(logits, target)

    loss_nc = out[:, :, 0]                     # [N, C] per-batch per-class dice loss
    per_class = jnp.mean(loss_nc, axis=0)      # mean over batch -> [C]
    if 0 <= int(ignore_index) < C:
        per_class = per_class.at[int(ignore_index)].set(0.0)  # class skipped in the loop
    return jnp.sum(per_class) / jnp.float32(C)


def _reference_dice_loss(logits_nchw, target_nhw, smooth=1.0, ignore_index=-1):
    # Pure-JAX reference mirroring the PyTorch module (for sanity checking).
    N, C, H, W = logits_nchw.shape
    probs = jax.nn.softmax(logits_nchw.astype(jnp.float32), axis=1)
    valid = (target_nhw != ignore_index).astype(jnp.float32).reshape(N, -1)
    onehot = jax.nn.one_hot(jnp.maximum(target_nhw, 0), C, dtype=jnp.float32)  # [N,H,W,C]
    total = jnp.float32(0.0)
    for i in range(C):
        pr = probs[:, i].reshape(N, -1)
        tg = onehot[..., i].reshape(N, -1)
        num = jnp.sum(pr * tg * valid, axis=1) * 2.0 + smooth
        den = jnp.sum((pr * pr + tg * tg) * valid, axis=1) + smooth
        total = total + jnp.mean(1.0 - num / den)
    return total / C


if __name__ == "__main__":
    key = jax.random.PRNGKey(0)
    k1, k2, k3 = jax.random.split(key, 3)

    N, C, H, W = 2, 4, 16, 16
    logits = jax.random.normal(k1, (N, C, H, W), dtype=jnp.float32)
    target = jax.random.randint(k2, (N, H, W), 0, C, dtype=jnp.int32)
    # Sprinkle a few ignore_index (-1) pixels to exercise the valid mask.
    ignore = jax.random.bernoulli(k3, 0.1, (N, H, W))
    target = jnp.where(ignore, jnp.int32(-1), target)

    ref = jax.block_until_ready(_reference_dice_loss(logits, target))

    # Default tile (single HW tile for this small shape).
    loss = jax.block_until_ready(dice_loss(logits, target, smooth=1.0, ignore_index=-1))
    assert jnp.allclose(loss, ref, atol=1e-5, rtol=1e-5), (loss, ref)

    # Force multiple HW tiles to exercise the scratch accumulator / pl.when path.
    loss_tiled = jax.block_until_ready(
        dice_loss(logits, target, smooth=1.0, ignore_index=-1, tile_hw=128)
    )
    assert jnp.allclose(loss_tiled, ref, atol=1e-5, rtol=1e-5), (loss_tiled, ref)

    print("KERNEL_OK")
</pallas_src>

<mosaic_0001>
module attributes {stable_mosaic.version = 11 : i64} {
  func.func @_dice_partial_kernel(%arg0: i32, %arg1: i32, %arg2: memref<1x4x256xf32, #tpu.memory_space<vmem>>, %arg3: memref<1x1x256xi32, #tpu.memory_space<vmem>>, %arg4: memref<1x4x128xf32, #tpu.memory_space<vmem>>, %arg5: memref<4x1xf32, #tpu.memory_space<vmem>>, %arg6: memref<4x1xf32, #tpu.memory_space<vmem>>, %arg7: memref<4x1xf32, #tpu.memory_space<vmem>>) attributes {dimension_semantics = [#tpu.dimension_semantics<parallel>, #tpu.dimension_semantics<arbitrary>], iteration_bounds = array<i64: 2, 1>, scalar_prefetch = 0 : i64, scratch_operands = 3 : i64, tpu.core_type = #tpu.core_type<tc>, window_params = [{transform_indices = @transform_0, window_bounds = array<i64: 1, 4, 256>}, {transform_indices = @transform_1, window_bounds = array<i64: 1, 1, 256>}, {transform_indices = @transform_2, window_bounds = array<i64: 1, 4, 128>}]} {
    %c0_i32 = arith.constant 0 : i32
    %0 = arith.cmpi eq, %arg1, %c0_i32 : i32
    %1 = arith.extui %0 : i1 to i32
    %c0_i32_0 = arith.constant 0 : i32
    %2 = arith.cmpi ne, %1, %c0_i32_0 : i32
    scf.if %2 {
      %cst_25 = arith.constant 0.000000e+00 : f32
      %49 = vector.broadcast %cst_25 : f32 to vector<4x1xf32>
      %c0_26 = arith.constant 0 : index
      %c0_27 = arith.constant 0 : index
      %50 = vector.load %arg5[%c0_26, %c0_27] : memref<4x1xf32, #tpu.memory_space<vmem>>, vector<4x1xf32>
      tpu.vector_store %arg5[%c0_26, %c0_27], %49 {strides = array<i32>} : memref<4x1xf32, #tpu.memory_space<vmem>>, vector<4x1xf32>,
      %cst_28 = arith.constant 0.000000e+00 : f32
      %51 = vector.broadcast %cst_28 : f32 to vector<4x1xf32>
      %c0_29 = arith.constant 0 : index
      %c0_30 = arith.constant 0 : index
      %52 = vector.load %arg6[%c0_29, %c0_30] : memref<4x1xf32, #tpu.memory_space<vmem>>, vector<4x1xf32>
      tpu.vector_store %arg6[%c0_29, %c0_30], %51 {strides = array<i32>} : memref<4x1xf32, #tpu.memory_space<vmem>>, vector<4x1xf32>,
      %cst_31 = arith.constant 0.000000e+00 : f32
      %53 = vector.broadcast %cst_31 : f32 to vector<4x1xf32>
      %c0_32 = arith.constant 0 : index
      %c0_33 = arith.constant 0 : index
      %54 = vector.load %arg7[%c0_32, %c0_33] : memref<4x1xf32, #tpu.memory_space<vmem>>, vector<4x1xf32>
      tpu.vector_store %arg7[%c0_32, %c0_33], %53 {strides = array<i32>} : memref<4x1xf32, #tpu.memory_space<vmem>>, vector<4x1xf32>,
    } else {
    }
    %c0 = arith.constant 0 : index
    %c0_1 = arith.constant 0 : index
    %c0_2 = arith.constant 0 : index
    %3 = vector.load %arg2[%c0, %c0_1, %c0_2] : memref<1x4x256xf32, #tpu.memory_space<vmem>>, vector<1x4x256xf32>
    %4 = vector.shape_cast %3 : vector<1x4x256xf32> to vector<4x256xf32>
    %c0_3 = arith.constant 0 : index
    %c0_4 = arith.constant 0 : index
    %c0_5 = arith.constant 0 : index
    %5 = vector.load %arg3[%c0_3, %c0_4, %c0_5] : memref<1x1x256xi32, #tpu.memory_space<vmem>>, vector<1x1x256xi32>
    %6 = vector.shape_cast %5 : vector<1x1x256xi32> to vector<1x256xi32>
    %cst = arith.constant dense<0xFF800000> : vector<256xf32>
    %7 = vector.multi_reduction <maximumf>, %4, %cst [0] : vector<4x256xf32> to vector<256xf32>
    %8 = vector.shape_cast %7 : vector<256xf32> to vector<1x256xf32>
    %9 = vector.broadcast %8 : vector<1x256xf32> to vector<4x256xf32>
    %10 = arith.subf %4, %9 : vector<4x256xf32>
    %11 = math.exp %10 : vector<4x256xf32>
    %cst_6 = arith.constant dense<0.000000e+00> : vector<256xf32>
    %12 = vector.multi_reduction <add>, %11, %cst_6 [0] : vector<4x256xf32> to vector<256xf32>
    %13 = vector.shape_cast %12 : vector<256xf32> to vector<1x256xf32>
    %14 = tpu.reciprocal %13 : vector<1x256xf32> -> vector<1x256xf32>
    %15 = vector.broadcast %14 : vector<1x256xf32> to vector<4x256xf32>
    %16 = arith.mulf %11, %15 : vector<4x256xf32>
    %c-1_i32 = arith.constant -1 : i32
    %17 = vector.broadcast %c-1_i32 : i32 to vector<1x256xi32>
    %18 = arith.cmpi ne, %6, %17 : vector<1x256xi32>
    %19 = tpu.iota {dimensions = array<i32: 0>} : vector<4x256xi32>
    %20 = vector.broadcast %6 : vector<1x256xi32> to vector<4x256xi32>
    %21 = arith.cmpi eq, %20, %19 : vector<4x256xi32>
    %22 = arith.extui %18 : vector<1x256xi1> to vector<1x256xi32>
    %23 = arith.sitofp %22 : vector<1x256xi32> to vector<1x256xf32>
    %c0_7 = arith.constant 0 : index
    %c0_8 = arith.constant 0 : index
    %24 = vector.load %arg5[%c0_7, %c0_8] : memref<4x1xf32, #tpu.memory_space<vmem>>, vector<4x1xf32>
    %cst_9 = arith.constant 0.000000e+00 : f32
    %25 = vector.broadcast %cst_9 : f32 to vector<4x256xf32>
    %26 = arith.select %21, %16, %25 : vector<4x256xi1>, vector<4x256xf32>
    %cst_10 = arith.constant dense<0.000000e+00> : vector<4xf32>
    %27 = vector.multi_reduction <add>, %26, %cst_10 [1] : vector<4x256xf32> to vector<4xf32>
    %28 = vector.shape_cast %27 : vector<4xf32> to vector<4x1xf32>
    %29 = arith.addf %24, %28 : vector<4x1xf32>
    %c0_11 = arith.constant 0 : index
    %c0_12 = arith.constant 0 : index
    %30 = vector.load %arg5[%c0_11, %c0_12] : memref<4x1xf32, #tpu.memory_space<vmem>>, vector<4x1xf32>
    tpu.vector_store %arg5[%c0_11, %c0_12], %29 {strides = array<i32>} : memref<4x1xf32, #tpu.memory_space<vmem>>, vector<4x1xf32>,
    %c0_13 = arith.constant 0 : index
    %c0_14 = arith.constant 0 : index
    %31 = vector.load %arg6[%c0_13, %c0_14] : memref<4x1xf32, #tpu.memory_space<vmem>>, vector<4x1xf32>
    %32 = arith.mulf %16, %16 : vector<4x256xf32>
    %33 = vector.broadcast %23 : vector<1x256xf32> to vector<4x256xf32>
    %34 = arith.mulf %32, %33 : vector<4x256xf32>
    %cst_15 = arith.constant dense<0.000000e+00> : vector<4xf32>
    %35 = vector.multi_reduction <add>, %34, %cst_15 [1] : vector<4x256xf32> to vector<4xf32>
    %36 = vector.shape_cast %35 : vector<4xf32> to vector<4x1xf32>
    %37 = arith.addf %31, %36 : vector<4x1xf32>
    %c0_16 = arith.constant 0 : index
    %c0_17 = arith.constant 0 : index
    %38 = vector.load %arg6[%c0_16, %c0_17] : memref<4x1xf32, #tpu.memory_space<vmem>>, vector<4x1xf32>
    tpu.vector_store %arg6[%c0_16, %c0_17], %37 {strides = array<i32>} : memref<4x1xf32, #tpu.memory_space<vmem>>, vector<4x1xf32>,
    %c0_18 = arith.constant 0 : index
    %c0_19 = arith.constant 0 : index
    %39 = vector.load %arg7[%c0_18, %c0_19] : memref<4x1xf32, #tpu.memory_space<vmem>>, vector<4x1xf32>
    %40 = arith.extui %21 : vector<4x256xi1> to vector<4x256xi32>
    %41 = arith.sitofp %40 : vector<4x256xi32> to vector<4x256xf32>
    %cst_20 = arith.constant dense<0.000000e+00> : vector<4xf32>
    %42 = vector.multi_reduction <add>, %41, %cst_20 [1] : vector<4x256xf32> to vector<4xf32>
    %43 = vector.shape_cast %42 : vector<4xf32> to vector<4x1xf32>
    %44 = arith.addf %39, %43 : vector<4x1xf32>
    %c0_21 = arith.constant 0 : index
    %c0_22 = arith.constant 0 : index
    %45 = vector.load %arg7[%c0_21, %c0_22] : memref<4x1xf32, #tpu.memory_space<vmem>>, vector<4x1xf32>
    tpu.vector_store %arg7[%c0_21, %c0_22], %44 {strides = array<i32>} : memref<4x1xf32, #tpu.memory_space<vmem>>, vector<4x1xf32>,
    %c0_i32_23 = arith.constant 0 : i32
    %46 = arith.cmpi eq, %arg1, %c0_i32_23 : i32
    %47 = arith.extui %46 : i1 to i32
    %c0_i32_24 = arith.constant 0 : i32
    %48 = arith.cmpi ne, %47, %c0_i32_24 : i32
    scf.if %48 {
      %c0_25 = arith.constant 0 : index
      %c0_26 = arith.constant 0 : index
      %49 = vector.load %arg5[%c0_25, %c0_26] : memref<4x1xf32, #tpu.memory_space<vmem>>, vector<4x1xf32>
      %cst_27 = arith.constant 2.000000e+00 : f32
      %50 = vector.broadcast %cst_27 : f32 to vector<4x1xf32>
      %51 = arith.mulf %49, %50 : vector<4x1xf32>
      %cst_28 = arith.constant 1.000000e+00 : f32
      %52 = vector.broadcast %cst_28 : f32 to vector<4x1xf32>
      %53 = arith.addf %51, %52 : vector<4x1xf32>
      %c0_29 = arith.constant 0 : index
      %c0_30 = arith.constant 0 : index
      %54 = vector.load %arg6[%c0_29, %c0_30] : memref<4x1xf32, #tpu.memory_space<vmem>>, vector<4x1xf32>
      %c0_31 = arith.constant 0 : index
      %c0_32 = arith.constant 0 : index
      %55 = vector.load %arg7[%c0_31, %c0_32] : memref<4x1xf32, #tpu.memory_space<vmem>>, vector<4x1xf32>
      %56 = arith.addf %54, %55 : vector<4x1xf32>
      %cst_33 = arith.constant 1.000000e+00 : f32
      %57 = vector.broadcast %cst_33 : f32 to vector<4x1xf32>
      %58 = arith.addf %56, %57 : vector<4x1xf32>
      %59 = arith.divf %53, %58 : vector<4x1xf32>
      %cst_34 = arith.constant 1.000000e+00 : f32
      %60 = vector.broadcast %cst_34 : f32 to vector<4x1xf32>
      %61 = arith.subf %60, %59 : vector<4x1xf32>
      %62 = vector.shape_cast %61 : vector<4x1xf32> to vector<4x1xf32>
      %63 = vector.broadcast %62 : vector<4x1xf32> to vector<4x128xf32>
      %c0_35 = arith.constant 0 : index
      %c0_36 = arith.constant 0 : index
      %c0_37 = arith.constant 0 : index
      %64 = vector.load %arg4[%c0_35, %c0_36, %c0_37] : memref<1x4x128xf32, #tpu.memory_space<vmem>>, vector<1x4x128xf32>
      %65 = vector.shape_cast %64 : vector<1x4x128xf32> to vector<4x128xf32>
      %66 = vector.shape_cast %63 : vector<4x128xf32> to vector<1x4x128xf32>
      tpu.vector_store %arg4[%c0_35, %c0_36, %c0_37], %66 {strides = array<i32>} : memref<1x4x128xf32, #tpu.memory_space<vmem>>, vector<1x4x128xf32>,
    } else {
    }
    return
  }
  func.func @transform_0(%arg0: i32, %arg1: i32) -> (i32, i32, i32) {
    %c0_i32 = arith.constant 0 : i32
    %c0_i32_0 = arith.constant 0 : i32
    return %arg0, %c0_i32, %arg1 : i32, i32, i32
  }
  func.func @transform_1(%arg0: i32, %arg1: i32) -> (i32, i32, i32) {
    %c0_i32 = arith.constant 0 : i32
    %c0_i32_0 = arith.constant 0 : i32
    return %arg0, %c0_i32, %arg1 : i32, i32, i32
  }
  func.func @transform_2(%arg0: i32, %arg1: i32) -> (i32, i32, i32) {
    %c0_i32 = arith.constant 0 : i32
    %c0_i32_0 = arith.constant 0 : i32
    %c0_i32_1 = arith.constant 0 : i32
    return %arg0, %c0_i32, %c0_i32_0 : i32, i32, i32
  }
}

</mosaic_0001>

<llo_original>
// kernel: tpu_custom_call.1
$region0: #{tpu_custom_call.1}
  #allocation0 [shape = 'u32[]', space=smem, size = 0x4, offset = 0x4, fixed_abs, tag = 'smem constant byte address 0x4 - core index']
  #allocation1 [shape = 'u32[72,128]{1,0:T(1,128)}', space=vmem, size = 0x9000, scoped, tag = 'internal scratch']
  #allocation2 [shape = 'f32[4,1]{1,0:T(4,128)}', space=vmem, size = 0x800, scoped, tag = 'scratch operand']
  #allocation3 [shape = 'f32[4,1]{1,0:T(4,128)}', space=vmem, size = 0x800, scoped, tag = 'scratch operand']
  #allocation4 [shape = 'f32[4,1]{1,0:T(4,128)}', space=vmem, size = 0x800, scoped, tag = 'scratch operand']
  %s0 = inlined_call_operand.hbm [shape: f32[2,4,256], index: 0, kind: input, shape index: {}]
  %s1 = inlined_call_operand.hbm [shape: s32[2,1,256], index: 1, kind: input, shape index: {}]
  %s2 = inlined_call_operand.hbm [shape: f32[2,4,128], index: 2, kind: output, shape index: {}]
  %s3 = sld [smem:[#allocation0]]
  $region57: #{tpu_custom_call.1} parent=0
    _
  %s5 = ssub.s32 1, %s3
  %s6 = scalar_select 0, %s5, %s3
  $region1: #{tpu_custom_call.1} parent=0
    #allocation5 [shape = 'u8[8192]{0}', space=vmem, size = 0x2000, scoped, tag = 'input window, operand 0']
    #allocation6 [shape = 's32[2]{0}', space=sflag, size = 0x8, scoped, tag = 'scoped memory for tpu_custom_call.1']
    #allocation7 [shape = 's32[2]{0}', space=sflag, size = 0x8, scoped, tag = 'scoped memory for tpu_custom_call.1']
    #allocation8 [shape = 'u8[2048]{0}', space=vmem, size = 0x800, scoped, tag = 'input window, operand 1']
    #allocation9 [shape = 's32[2]{0}', space=sflag, size = 0x8, scoped, tag = 'scoped memory for tpu_custom_call.1']
    #allocation10 [shape = 'u8[4096]{0}', space=vmem, size = 0x1000, scoped, tag = 'output window, operand 0']
    %7 = vsyncpa [#allocation6], 0
    %s8 = scalar_lea.sflag [#allocation6], 1
    %9 = vsyncpa %s8, 0
    %10 = vsyncpa [#allocation9], 0
    %s11 = scalar_lea.sflag [#allocation9], 1
    %12 = vsyncpa %s11, 0
    %13 = vsyncpa [#allocation7], 0
    %s14 = scalar_lea.sflag [#allocation7], 1
    %15 = vsyncpa %s14, 0
    loop: start=0, step=1, limit=4
    $region2: #{tpu_custom_call.1} parent=1 // loop_pre_header
      _
    $region3: #{tpu_custom_call.1} parent=1 // loop_header
      %s17 = sphi 0, %s21
      %p18 = scmp.ge.s32.totalorder %s17, 4
      %s24 = sphi 0, %s36
      %s25 = sphi 0, %s32
      %s26 = sphi 0, %s24
      %s27 = sphi 0, %s25
      %s28 = sphi 0, %s26
      %s29 = sphi 0, %s27
      %s41 = sphi 0, %s43
      %s44 = sphi 0, %s41
      %s45 = sphi 0, %s44
      %s61 = sphi 0, %s45
      %s69 = sphi 0, %s71
      %s72 = sphi 0, %s69
      %s73 = sphi 0, %s72
      %s89 = sphi 0, %s73
      %s95 = sphi 0, %s97
      %s98 = sphi 0, %s95
      %s99 = sphi 0, %s98
      %s115 = sphi 0, %s99
    $region4: #{tpu_custom_call.1} parent=1 // loop_header_branch
      %20 = sbr.rel (%p18) target = $region8
    $region5: #{tpu_custom_call.1} parent=1 // loop_body
      %s22 = ssub.s32 %s17, 1
      %s23 = ssub.s32 %s17, 2
      %s30 = sadd.s32 1, %s25
      %p31 = scmp.ge.s32.totalorder %s30, 1
      %s32 = scalar_select %p31, 0, %s30
      %s33 = sadd.s32 1, %s24
      %s34 = scalar_select %p31, %s33, %s24
      %p35 = scmp.ge.s32.totalorder %s34, 2
      %s36 = scalar_select %p35, 0, %s34
      %s37 = ssub.s32 %s24, %s36
      %s38 = ssub.s32 %s25, %s32
      %s39 = sor.u32 %s37, %s38
      %p40 = scmp.eq.s32.totalorder %s39, 0
      %s42 = sadd.s32 %s41, 1
      %s43 = scalar_select %p40, %s41, %s42
      %p46 = pneg %p40
      %p47 = scmp.eq.s32.totalorder %s17, 1
      %p48 = por %p46, %p47
      %p49 = scmp.ne.s32.totalorder %s41, %s44
      %p50 = scmp.eq.s32.totalorder %s17, 0
      %p51 = por %p49, %p50
      %p52 = scmp.ne.s32.totalorder %s41, %s44
      %p53 = scmp.eq.s32.totalorder %s22, 1
      %p54 = por %p52, %p53
      %p55 = scmp.ne.s32.totalorder %s44, %s45
      %p56 = scmp.eq.s32.totalorder %s22, 0
      %p57 = por %p55, %p56
      %p58 = scmp.ne.s32.totalorder %s44, %s45
      %p59 = scmp.eq.s32.totalorder %s23, 1
      %p60 = por %p58, %p59
      %p62 = scmp.ne.s32.totalorder %s45, %s61
      %p63 = scmp.eq.s32.totalorder %s23, 0
      %p64 = por %p62, %p63
      %s65 = ssub.s32 %s24, %s36
      %s66 = ssub.s32 %s25, %s32
      %s67 = sor.u32 %s65, %s66
      %p68 = scmp.eq.s32.totalorder %s67, 0
      %s70 = sadd.s32 %s69, 1
      %s71 = scalar_select %p68, %s69, %s70
      %p74 = pneg %p68
      %p75 = scmp.eq.s32.totalorder %s17, 1
      %p76 = por %p74, %p75
      %p77 = scmp.ne.s32.totalorder %s69, %s72
      %p78 = scmp.eq.s32.totalorder %s17, 0
      %p79 = por %p77, %p78
      %p80 = scmp.ne.s32.totalorder %s69, %s72
      %p81 = scmp.eq.s32.totalorder %s22, 1
      %p82 = por %p80, %p81
      %p83 = scmp.ne.s32.totalorder %s72, %s73
      %p84 = scmp.eq.s32.totalorder %s22, 0
      %p85 = por %p83, %p84
      %p86 = scmp.ne.s32.totalorder %s72, %s73
      %p87 = scmp.eq.s32.totalorder %s23, 1
      %p88 = por %p86, %p87
      %p90 = scmp.ne.s32.totalorder %s73, %s89
      %p91 = scmp.eq.s32.totalorder %s23, 0
      %p92 = por %p90, %p91
      %s93 = ssub.s32 %s24, %s36
      %p94 = scmp.eq.s32.totalorder %s93, 0
      %s96 = sadd.s32 %s95, 1
      %s97 = scalar_select %p94, %s95, %s96
      %p100 = pneg %p94
      %p101 = scmp.eq.s32.totalorder %s17, 1
      %p102 = por %p100, %p101
      %p103 = scmp.ne.s32.totalorder %s95, %s98
      %p104 = scmp.eq.s32.totalorder %s17, 0
      %p105 = por %p103, %p104
      %p106 = scmp.ne.s32.totalorder %s95, %s98
      %p107 = scmp.eq.s32.totalorder %s22, 1
      %p108 = por %p106, %p107
      %p109 = scmp.ne.s32.totalorder %s98, %s99
      %p110 = scmp.eq.s32.totalorder %s22, 0
      %p111 = por %p109, %p110
      %p112 = scmp.ne.s32.totalorder %s98, %s99
      %p113 = scmp.eq.s32.totalorder %s23, 1
      %p114 = por %p112, %p113
      %p116 = scmp.ne.s32.totalorder %s99, %s115
      %p117 = scmp.eq.s32.totalorder %s23, 0
      %p118 = por %p116, %p117
      %p119 = scmp.le.s32.totalorder 1, %s17
      %p120 = scmp.lt.s32.totalorder %s17, 3
      %p121 = pnand %p119, %p120
      %p122 = pneg %p121
      // Predicated region
      $region9: #{tpu_custom_call.1} parent=5 // pred_check
        _
      $region10: #{tpu_custom_call.1} parent=5 // pred_check_branch
        %124 = sbr.rel (%p121) target = $region12
      $region11: #{tpu_custom_call.1} parent=5 // pred_region
        %s125 = ssub.s32 %s17, 1
      $region12: #{tpu_custom_call.1} parent=5 // pred_fallthru
        _
      %p126 = scmp.lt.s32.totalorder %s17, 2
      // Predicated region
      $region13: #{tpu_custom_call.1} parent=5 // pred_check
        %p127 = pneg %p126
      $region14: #{tpu_custom_call.1} parent=5 // pred_check_branch
        %129 = sbr.rel (%p127) target = $region16
      $region15: #{tpu_custom_call.1} parent=5 // pred_region
        // Predicated region
        $region17: #{tpu_custom_call.1} parent=15 // pred_check
          %p130 = pneg %p51
        $region18: #{tpu_custom_call.1} parent=15 // pred_check_branch
          %132 = sbr.rel (%p130) target = $region20
        $region19: #{tpu_custom_call.1} parent=15 // pred_region
          %s133 = sand.u32 %s41, 1
          %s134 = scalar_lea.sflag [#allocation6], %s133
          %s135 = sand.u32 %s41, 1
          %s136 = smul.addr %s135, 8
          %s137 = scalar_lea.vmem [#allocation5], %s136
          %s138 = smul.u32 2, %s25
          %140 = vsyncadd %s134, 0
          %s141 = smul.addr %s24, 2
          %s142 = sadd.s32 %s138, %s141
          %s143 = smul.addr %s142, 4
          %s144 = scalar_lea.hbm %s0, %s143
          %s146 = sshll.u32 %s144, 4
          %s147 = int_to_ptr.hbm [resolvable:$true] %s146
          %s148 = sshll.u32 %s137, 4
          %s149 = int_to_ptr.vmem [resolvable:$true] %s148
          %151 = dma.hbm_to_vmem [thread:$0]  %s147, 128, %s149, %s134
        $region20: #{tpu_custom_call.1} parent=15 // pred_fallthru
          _
        // Predicated region
        $region21: #{tpu_custom_call.1} parent=15 // pred_check
          %p152 = pneg %p79
        $region22: #{tpu_custom_call.1} parent=15 // pred_check_branch
          %154 = sbr.rel (%p152) target = $region24
        $region23: #{tpu_custom_call.1} parent=15 // pred_region
          %s155 = sand.u32 %s69, 1
          %s156 = scalar_lea.sflag [#allocation9], %s155
          %s157 = sand.u32 %s69, 1
          %s158 = smul.addr %s157, 2
          %s159 = scalar_lea.vmem [#allocation8], %s158
          %s160 = smul.u32 2, %s25
          %162 = vsyncadd %s156, 0
          %s163 = smul.addr %s24, 2
          %s164 = sadd.s32 %s160, %s163
          %s165 = scalar_lea.hbm %s1, %s164
          %s167 = sshll.u32 %s165, 4
          %s168 = int_to_ptr.hbm [resolvable:$true] %s167
          %s169 = sshll.u32 %s159, 4
          %s170 = int_to_ptr.vmem [resolvable:$true] %s169
          %172 = dma.hbm_to_vmem [thread:$0]  %s168, 32, %s170, %s156
        $region24: #{tpu_custom_call.1} parent=15 // pred_fallthru
          _
      $region16: #{tpu_custom_call.1} parent=5 // pred_fallthru
        _
      %p173 = scmp.le.s32.totalorder 1, %s17
      %p174 = scmp.lt.s32.totalorder %s17, 3
      %p175 = pnand %p173, %p174
      %p176 = pneg %p175
      // Predicated region
      $region25: #{tpu_custom_call.1} parent=5 // pred_check
        _
      $region26: #{tpu_custom_call.1} parent=5 // pred_check_branch
        %178 = sbr.rel (%p175) target = $region28
      $region27: #{tpu_custom_call.1} parent=5 // pred_region
        %s179 = ssub.s32 %s17, 1
        %s180 = sand.u32 %s44, 1
        %s181 = scalar_lea.sflag [#allocation6], %s180
        %s182 = sand.u32 %s44, 1
        %s183 = smul.addr %s182, 8
        %s184 = scalar_lea.vmem [#allocation5], %s183
        // Predicated region
        $region29: #{tpu_custom_call.1} parent=27 // pred_check
          %p185 = pneg %p57
        $region30: #{tpu_custom_call.1} parent=27 // pred_check_branch
          %187 = sbr.rel (%p185) target = $region32
        $region31: #{tpu_custom_call.1} parent=27 // pred_region
          %189 = dma.done %s181, 128
        $region32: #{tpu_custom_call.1} parent=27 // pred_fallthru
          _
        %s190 = sand.u32 %s72, 1
        %s191 = scalar_lea.sflag [#allocation9], %s190
        %s192 = sand.u32 %s72, 1
        %s193 = smul.addr %s192, 2
        %s194 = scalar_lea.vmem [#allocation8], %s193
        // Predicated region
        $region33: #{tpu_custom_call.1} parent=27 // pred_check
          %p195 = pneg %p85
        $region34: #{tpu_custom_call.1} parent=27 // pred_check_branch
          %197 = sbr.rel (%p195) target = $region36
        $region35: #{tpu_custom_call.1} parent=27 // pred_region
          %199 = dma.done %s191, 32
        $region36: #{tpu_custom_call.1} parent=27 // pred_fallthru
          _
        %s200 = sand.u32 %s44, 1
        %s201 = scalar_lea.sflag [#allocation6], %s200
        %s202 = sand.u32 %s44, 1
        %s203 = smul.addr %s202, 8
        %s204 = scalar_lea.vmem [#allocation5], %s203
        %p205 = pneg %p57
        %p206 = pneg %p54
        %s207 = sand.u32 %s72, 1
        %s208 = scalar_lea.sflag [#allocation9], %s207
        %s209 = sand.u32 %s72, 1
        %s210 = smul.addr %s209, 2
        %s211 = scalar_lea.vmem [#allocation8], %s210
        %p212 = pneg %p85
        %p213 = pneg %p82
        %p214 = pneg %p111
        %p215 = pneg %p108
        %s216 = sand.u32 %s98, 1
        %s217 = scalar_lea.sflag [#allocation7], %s216
        %s218 = sand.u32 %s98, 1
        %s219 = smul.addr %s218, 4
        %s220 = scalar_lea.vmem [#allocation10], %s219
        %s221 = smul.u32 2, %s27
        %s222 = smul.u32 2, %s27
        %p223 = scmp.eq.s32.totalorder %s27, 0
        // Predicated region
        $region37: #{tpu_custom_call.1} parent=27 // pred_check
          %p224 = pneg %p223
        $region38: #{tpu_custom_call.1} parent=27 // pred_check_branch
          %226 = sbr.rel (%p224) target = $region40
        $region39: #{tpu_custom_call.1} parent=27 // pred_region
          %vm227 = vcmask 3072
          %228 = vst.msk [vmem:[#allocation2] sm:$0xf] %vm227, 0.0
          %229 = vst.msk [vmem:[#allocation3] sm:$0xf] %vm227, 0.0
          %230 = vst.msk [vmem:[#allocation4] sm:$0xf] %vm227, 0.0
        $region40: #{tpu_custom_call.1} parent=27 // pred_fallthru
          _
        %v231 = vld [vmem:[%s184] sm:$0xff]
        %v232 = vld [vmem:[%s194] sm:$0x3]
        %234 = vst [vmem:[#allocation1] ss:$2 sm:$0xff] %v231
        %v235 = vld.sshfl [vmem:[#allocation1] sm:$0xff pattern:$0x75316420]
        %v236 = vld.sshfl [vmem:[#allocation1 + $0x8] sm:$0xff pattern:$0x75316420]
        %vm239 = vcmask 1043456
        %v240 = vsel %vm239, %v235, -inf
        %v241 = vrot.slane %v240, 4
        %v242 = vmax.f32 %v240, %v241
        %v243 = vrot.slane %v242, 2
        %v244 = vmax.f32 %v242, %v243
        %v245 = vrot.slane %v244, 1
        %v246 = vmax.f32 %v244, %v245
        %v247 = vsel %vm239, %v236, -inf
        %v248 = vrot.slane %v247, 4
        %v249 = vmax.f32 %v247, %v248
        %v250 = vrot.slane %v249, 2
        %v251 = vmax.f32 %v249, %v250
        %v252 = vrot.slane %v251, 1
        %v253 = vmax.f32 %v251, %v252
        %v256 = vrot.slane %v253, 4
        %v257 = vsel %vm239, %v246, %v256
        %v259 = vsub.f32 %v231, %v257
        %v260 = vmul.f32 %v259, 1.442695
        %v261 = vpow.pop %v260
        %263 = vst [vmem:[#allocation1] ss:$2 sm:$0xff] %v261
        %v264 = vld.sshfl [vmem:[#allocation1] sm:$0xff pattern:$0x75316420]
        %v265 = vld.sshfl [vmem:[#allocation1 + $0x8] sm:$0xff pattern:$0x75316420]
        %v268 = vsel %vm239, %v264, 0.0
        %v269 = vrot.slane %v268, 4
        %v270 = vadd.f32 %v268, %v269
        %v271 = vrot.slane %v270, 2
        %v272 = vadd.f32 %v270, %v271
        %v273 = vrot.slane %v272, 1
        %v274 = vadd.f32 %v272, %v273
        %v275 = vsel %vm239, %v265, 0.0
        %v276 = vrot.slane %v275, 4
        %v277 = vadd.f32 %v275, %v276
        %v278 = vrot.slane %v277, 2
        %v279 = vadd.f32 %v277, %v278
        %v280 = vrot.slane %v279, 1
        %v281 = vadd.f32 %v279, %v280
        %v282 = vrcp.pop %v274
        %v283 = vmul.f32 %v274, %v282
        %v284 = vsub.f32 1.0, %v283
        %v285 = vmul.f32 %v282, %v284
        %v286 = vadd.f32 %v282, %v285
        %vm287 = vweird.f32 %v274
        %vm288 = vweird.f32 %v282
        %vm289 = vmor %vm287, %vm288
        %v290 = vsel %vm289, %v282, %v286
        %v291 = vand.u32 2147483647, %v274
        %vm292 = vcmp.eq.f32.partialorder %v291, 8.507059e+37
        %v293 = vand.u32 %v274, 2147483648
        %v294 = vor.u32 1.1754944e-38, %v293
        %v295 = vsel %vm292, %v294, %v290
        %v296 = vrcp.pop %v281
        %v297 = vmul.f32 %v281, %v296
        %v298 = vsub.f32 1.0, %v297
        %v299 = vmul.f32 %v296, %v298
        %v300 = vadd.f32 %v296, %v299
        %vm301 = vweird.f32 %v281
        %vm302 = vweird.f32 %v296
        %vm303 = vmor %vm301, %vm302
        %v304 = vsel %vm303, %v296, %v300
        %v305 = vand.u32 2147483647, %v281
        %vm306 = vcmp.eq.f32.partialorder %v305, 8.507059e+37
        %v307 = vand.u32 %v281, 2147483648
        %v308 = vor.u32 1.1754944e-38, %v307
        %v309 = vsel %vm306, %v308, %v304
        %v312 = vrot.slane %v309, 4
        %v313 = vsel %vm239, %v295, %v312
        %v315 = vmul.f32 %v261, %v313
        %vm316 = vcmp.ne.s32.totalorder %v232, 4294967295
        %v317 = vlaneseq
        %v318 = vshrl.u32 %v317, 7
        %v319 = vperm.slane %v232, 0
        %v320 = vperm.slane %v232, 1
        %vm321 = vcmp.eq.s32.totalorder %v319, %v318
        %vm322 = vcmp.eq.s32.totalorder %v320, %v318
        %v323 = vsel %vm316, 1, 0
        %v324 = vcvt.s32.f32 %v323
        %v325 = vld [vmem:[#allocation2] sm:$0xf]
        %327 = vst [vmem:[#allocation1] ss:$2 sm:$0xff] %v315
        %v328 = vld.sshfl [vmem:[#allocation1] sm:$0xff pattern:$0x75316420]
        %v329 = vld.sshfl [vmem:[#allocation1 + $0x8] sm:$0xff pattern:$0x75316420]
        %v332 = vsel %vm321, %v328, 0.0
        %v333 = vsel %vm322, %v329, 0.0
        %v334 = vsel %vm239, %v332, 0.0
        %v335 = vsel %vm239, %v333, 0.0
        %v336 = vadd.f32 %v334, %v335
        %337 = vadd.xlane.f32.xlu0 %v336
        %v338 = vpop.xlane.xlu0 %337
        %v339 = vadd.f32 %v325, %v338
        %vm340 = vcmask 3072
        %341 = vst.msk [vmem:[#allocation2] sm:$0xf] %vm340, %v339
        %v342 = vld [vmem:[#allocation3] sm:$0xf]
        %v343 = vmul.f32 %v315, %v315
        %v345 = vperm.slane %v324, 0
        %v346 = vperm.slane %v324, 1
        %v347 = vrot.slane %v346, 4
        %v348 = vsel %vm239, %v345, %v347
        %v350 = vmul.f32 %v343, %v348
        %352 = vst [vmem:[#allocation1] ss:$2 sm:$0xff] %v350
        %v353 = vld.sshfl [vmem:[#allocation1] sm:$0xff pattern:$0x75316420]
        %v354 = vld.sshfl [vmem:[#allocation1 + $0x8] sm:$0xff pattern:$0x75316420]
        %v357 = vsel %vm239, %v353, 0.0
        %v358 = vsel %vm239, %v354, 0.0
        %v359 = vadd.f32 %v357, %v358
        %360 = vadd.xlane.f32.xlu0 %v359
        %v361 = vpop.xlane.xlu0 %360
        %v362 = vadd.f32 %v342, %v361
        %363 = vst.msk [vmem:[#allocation3] sm:$0xf] %vm340, %v362
        %v364 = vld [vmem:[#allocation4] sm:$0xf]
        %v365 = vsel %vm321, 1, 0
        %v366 = vsel %vm322, 1, 0
        %v367 = vcvt.s32.f32 %v365
        %v368 = vcvt.s32.f32 %v366
        %v369 = vsel %vm239, %v367, 0.0
        %v370 = vsel %vm239, %v368, 0.0
        %v371 = vadd.f32 %v369, %v370
        %372 = vadd.xlane.f32.xlu0 %v371
        %v373 = vpop.xlane.xlu0 %372
        %v374 = vadd.f32 %v364, %v373
        %375 = vst.msk [vmem:[#allocation4] sm:$0xf] %vm340, %v374
        // Predicated region
        $region41: #{tpu_custom_call.1} parent=27 // pred_check
          %p376 = pneg %p223
        $region42: #{tpu_custom_call.1} parent=27 // pred_check_branch
          %378 = sbr.rel (%p376) target = $region44
        $region43: #{tpu_custom_call.1} parent=27 // pred_region
          %v379 = vld [vmem:[#allocation2] sm:$0xf]
          %v380 = vmul.f32 %v379, 2.0
          %v381 = vadd.f32 %v380, 1.0
          %v382 = vld [vmem:[#allocation3] sm:$0xf]
          %v383 = vld [vmem:[#allocation4] sm:$0xf]
          %v384 = vadd.f32 %v382, %v383
          %v385 = vadd.f32 %v384, 1.0
          %v386 = vrcp.pop %v385
          %v387 = vmul.f32 %v385, %v386
          %v388 = vsub.f32 1.0, %v387
          %v389 = vmul.f32 %v386, %v388
          %v390 = vadd.f32 %v386, %v389
          %vm391 = vweird.f32 %v385
          %vm392 = vweird.f32 %v386
          %vm393 = vmor %vm391, %vm392
          %v394 = vsel %vm393, %v386, %v390
          %v395 = vand.u32 2147483647, %v385
          %vm396 = vcmp.eq.f32.partialorder %v395, 8.507059e+37
          %v397 = vand.u32 %v385, 2147483648
          %v398 = vor.u32 1.1754944e-38, %v397
          %v399 = vsel %vm396, %v398, %v394
          %v400 = vmul.f32 %v381, %v399
          %v401 = vsub.f32 1.0, %v400
          %403 = vset.pattern.permute.xlu0 0
          %404 = vperm.xlu0 %403, %v401
          %v405 = vpop.permute.xlu0 %404
          %407 = vst [vmem:[%s220] sm:$0xf] %v405
        $region44: #{tpu_custom_call.1} parent=27 // pred_fallthru
          _
        %s408 = sand.u32 %s98, 1
        %s409 = scalar_lea.sflag [#allocation7], %s408
        %s410 = sand.u32 %s98, 1
        %s411 = smul.addr %s410, 4
        %s412 = scalar_lea.vmem [#allocation10], %s411
        // Predicated region
        $region45: #{tpu_custom_call.1} parent=27 // pred_check
          %p413 = pneg %p108
        $region46: #{tpu_custom_call.1} parent=27 // pred_check_branch
          %415 = sbr.rel (%p413) target = $region48
        $region47: #{tpu_custom_call.1} parent=27 // pred_region
          %417 = vsyncadd %s409, 0
          %s418 = smul.addr %s26, 4
          %s419 = scalar_lea.hbm %s2, %s418
          %s421 = sshll.u32 %s412, 4
          %s422 = int_to_ptr.vmem [resolvable:$true] %s421
          %s423 = sshll.u32 %s419, 4
          %s424 = int_to_ptr.hbm [resolvable:$true] %s423
          %426 = dma.vmem_to_hbm [thread:$0]  %s422, 64, %s424, %s409
        $region48: #{tpu_custom_call.1} parent=27 // pred_fallthru
          _
      $region28: #{tpu_custom_call.1} parent=5 // pred_fallthru
        _
      %p427 = scmp.le.s32.totalorder 2, %s17
      // Predicated region
      $region49: #{tpu_custom_call.1} parent=5 // pred_check
        %p428 = pneg %p427
      $region50: #{tpu_custom_call.1} parent=5 // pred_check_branch
        %430 = sbr.rel (%p428) target = $region52
      $region51: #{tpu_custom_call.1} parent=5 // pred_region
        %s431 = ssub.s32 %s17, 2
        // Predicated region
        $region53: #{tpu_custom_call.1} parent=51 // pred_check
          %p432 = pneg %p114
        $region54: #{tpu_custom_call.1} parent=51 // pred_check_branch
          %434 = sbr.rel (%p432) target = $region56
        $region55: #{tpu_custom_call.1} parent=51 // pred_region
          %s435 = sand.u32 %s99, 1
          %s436 = scalar_lea.sflag [#allocation7], %s435
          %s437 = sand.u32 %s99, 1
          %s438 = smul.addr %s437, 4
          %s439 = scalar_lea.vmem [#allocation10], %s438
          %441 = dma.done %s436, 64
        $region56: #{tpu_custom_call.1} parent=51 // pred_fallthru
          _
      $region52: #{tpu_custom_call.1} parent=5 // pred_fallthru
        _
    $region6: #{tpu_custom_call.1} parent=1 // loop_footer
      %s21 = sadd.s32 1, %s17
    $region7: #{tpu_custom_call.1} parent=1 // loop_footer_branch
      %16 = sbr.rel target = $region3
    $region8: #{tpu_custom_call.1} parent=1 // loop_exit
      _
    %442 = vsyncpa [#allocation6], 1
    %s443 = scalar_lea.sflag [#allocation6], 1
    %444 = vsyncpa %s443, 1
    %445 = vsyncpa [#allocation9], 1
    %s446 = scalar_lea.sflag [#allocation9], 1
    %447 = vsyncpa %s446, 1
    %448 = vsyncpa [#allocation7], 1
    %s449 = scalar_lea.sflag [#allocation7], 1
    %450 = vsyncpa %s449, 1

</llo_original>
